<compile_context>
chip_gen: v6e
topology: v6e:2x2x1
jax: 0.10.0
libtpu: 0.0.40
codegen_flags: <defaults>
</compile_context>

<pallas_src>
import functools

import jax
import jax.numpy as jnp
from jax.experimental import pallas as pl
from jax.experimental.pallas import tpu as pltpu


def _attention_kernel(x_ref, gamma_ref, beta_ref, wqkv_ref, wout_ref, o_ref,
                      *, heads, dim_head):
    bt, n, d = x_ref.shape
    inner = heads * dim_head

    # ---- LayerNorm (f32) over the feature axis for all block_b*N rows -----
    x = x_ref[...]                                            # (Bt, N, D) f32
    mean = jnp.mean(x, axis=-1, keepdims=True)
    var = jnp.mean((x - mean) ** 2, axis=-1, keepdims=True)
    xn = (x - mean) * jax.lax.rsqrt(var + 1e-5)               # eps matches nn.LayerNorm
    xn = xn * gamma_ref[0] + beta_ref[0]

    # ---- fused QKV projection: one (Bt*N, D) @ (D, 3*inner) MXU matmul ----
    # bf16 operands, f32 accumulation.  The softmax scale is already folded
    # into the q columns of wqkv by the wrapper.
    qkv = jnp.dot(xn.astype(jnp.bfloat16).reshape(bt * n, d), wqkv_ref[...],
                  preferred_element_type=jnp.float32)         # (Bt*N, 3*inner)
    qkv = qkv.reshape(bt, n, 3 * inner)

    # ---- per-head attention, fused into the body (unrolled; heads small) --
    # All softmax / PV math stays in f32; each head's output projection is
    # accumulated into an f32 register value -> single store at the end.
    acc = jnp.zeros((bt * n, d), jnp.float32)
    for h in range(heads):
        lo = h * dim_head
        q = qkv[:, :, lo:lo + dim_head]                       # pre-scaled q
        k = qkv[:, :, inner + lo:inner + lo + dim_head]
        v = qkv[:, :, 2 * inner + lo:2 * inner + lo + dim_head]

        dots = jnp.einsum('bqd,bkd->bqk', q, k,
                          preferred_element_type=jnp.float32)  # (Bt, N, N) f32
        m = jnp.max(dots, axis=-1, keepdims=True)
        e = jnp.exp(dots - m)                                  # f32
        denom = jnp.sum(e, axis=-1, keepdims=True)             # (Bt, N, 1) f32

        pv = jnp.einsum('bqk,bkd->bqd', e, v,
                        preferred_element_type=jnp.float32)    # (Bt, N, dh) f32
        # Normalize the small (Bt, N, dh) result with an EUP approximate
        # reciprocal instead of dividing the (N, N) matrix.
        head_out = (pv * pl.reciprocal(denom, approx=True)).reshape(bt * n, dim_head)

        # to_out contribution of this head: rows [lo, lo+dh) of w_out.
        acc = acc + jnp.dot(head_out.astype(jnp.bfloat16),
                            wout_ref[lo:lo + dim_head, :],
                            preferred_element_type=jnp.float32)

    o_ref[...] = acc.reshape(bt, n, d).astype(o_ref.dtype)


def attention_pallas(x, gamma, beta, w_qkv, w_out, *, heads, dim_head, block_b=1):
    """x: (B, N, D) float32; returns (B, N, D) float32."""
    B, N, D = x.shape
    inner = heads * dim_head
    assert w_qkv.shape == (D, 3 * inner)
    assert w_out.shape == (inner, D)
    assert B % block_b == 0
    scale = dim_head ** (-0.5)

    # Fold the softmax scale into the q columns of the fused QKV weight and
    # store the weights in bf16 (MXU fast path, half the weight DMA bytes).
    w_qkv_s = jnp.concatenate(
        [w_qkv[:, :inner] * scale, w_qkv[:, inner:]], axis=1
    ).astype(jnp.bfloat16)
    w_out_bf = w_out.astype(jnp.bfloat16)
    gamma2 = gamma.reshape(1, D).astype(jnp.float32)
    beta2 = beta.reshape(1, D).astype(jnp.float32)

    kernel = functools.partial(_attention_kernel, heads=heads, dim_head=dim_head)

    cost = pl.CostEstimate(
        flops=(2 * B * N * D * 3 * inner            # fused QKV projection
               + 4 * B * heads * N * N * dim_head   # scores + PV
               + 2 * B * N * inner * D),            # output projection
        transcendentals=B * heads * N * N,          # exp
        bytes_accessed=(4 * B * N * D               # x (f32)
                        + 4 * B * N * D             # out (f32)
                        + 2 * D * 3 * inner         # w_qkv (bf16)
                        + 2 * inner * D             # w_out (bf16)
                        + 8 * D),                   # gamma + beta (f32)
    )

    return pl.pallas_call(
        kernel,
        out_shape=jax.ShapeDtypeStruct((B, N, D), jnp.float32),
        grid_spec=pltpu.PrefetchScalarGridSpec(
            num_scalar_prefetch=0,
            grid=(B // block_b,),
            in_specs=[
                pl.BlockSpec((block_b, N, D), lambda b: (b, 0, 0)),   # x
                pl.BlockSpec((1, D), lambda b: (0, 0)),               # gamma
                pl.BlockSpec((1, D), lambda b: (0, 0)),               # beta
                pl.BlockSpec((D, 3 * inner), lambda b: (0, 0)),       # w_qkv (fetched once)
                pl.BlockSpec((inner, D), lambda b: (0, 0)),           # w_out (fetched once)
            ],
            out_specs=pl.BlockSpec((block_b, N, D), lambda b: (b, 0, 0)),
        ),
        compiler_params=pltpu.CompilerParams(
            dimension_semantics=("parallel",),      # shards batch across TCs on v7x
            vmem_limit_bytes=32 * 1024 * 1024,
        ),
        cost_estimate=cost,
    )(x, gamma2, beta2, w_qkv_s, w_out_bf)


def attention_ref(x, gamma, beta, w_qkv, w_out, *, heads, dim_head):
    """Pure-JAX (f32) reference mirroring the PyTorch forward."""
    B, N, D = x.shape
    inner = heads * dim_head
    mean = jnp.mean(x, axis=-1, keepdims=True)
    var = jnp.mean((x - mean) ** 2, axis=-1, keepdims=True)
    xn = (x - mean) / jnp.sqrt(var + 1e-5) * gamma + beta
    qkv = xn @ w_qkv
    q, k, v = jnp.split(qkv, 3, axis=-1)

    def to_heads(t):  # 'b n (h d) -> b h n d'
        return t.reshape(B, N, heads, dim_head).transpose(0, 2, 1, 3)

    q, k, v = map(to_heads, (q, k, v))
    dots = jnp.einsum("bhid,bhjd->bhij", q, k) * (dim_head ** -0.5)
    attn = jax.nn.softmax(dots, axis=-1)
    out = jnp.einsum("bhij,bhjd->bhid", attn, v)
    out = out.transpose(0, 2, 1, 3).reshape(B, N, inner)   # 'b h n d -> b n (h d)'
    return out @ w_out


if __name__ == "__main__":
    # Small, module-consistent shapes (dim_head=64 matches the module default).
    B, N, D = 2, 8, 32
    HEADS, DIM_HEAD = 2, 64
    INNER = HEADS * DIM_HEAD

    key = jax.random.PRNGKey(0)
    kx, kq, ko, kg, kb = jax.random.split(key, 5)

    x = jax.random.normal(kx, (B, N, D), dtype=jnp.float32)
    gamma = 1.0 + 0.1 * jax.random.normal(kg, (D,), dtype=jnp.float32)
    beta = 0.1 * jax.random.normal(kb, (D,), dtype=jnp.float32)
    w_qkv = jax.random.normal(kq, (D, 3 * INNER), dtype=jnp.float32) * (D ** -0.5)
    w_out = jax.random.normal(ko, (INNER, D), dtype=jnp.float32) * (INNER ** -0.5)

    # block_b=1 keeps the batch grid extent at 2 so both v7x TensorCores get
    # work; bump block_b at larger B to amortize per-step overhead further.
    out = attention_pallas(x, gamma, beta, w_qkv, w_out,
                           heads=HEADS, dim_head=DIM_HEAD, block_b=1)
    out = jax.block_until_ready(out)

    ref = attention_ref(x, gamma, beta, w_qkv, w_out,
                        heads=HEADS, dim_head=DIM_HEAD)
    assert out.shape == (B, N, D)
    # Tolerance accounts for bf16 MXU projection operands (f32 accumulation,
    # f32 softmax and PV) and the approximate softmax reciprocal.
    assert jnp.allclose(out, ref, atol=5e-2, rtol=5e-2), "mismatch vs reference"

    print("KERNEL_OK")
</pallas_src>

<mosaic_0001>
module attributes {stable_mosaic.version = 11 : i64} {
  func.func @_attention_kernel(%arg0: i32, %arg1: memref<1x8x32xf32, #tpu.memory_space<vmem>>, %arg2: memref<1x32xf32, #tpu.memory_space<vmem>>, %arg3: memref<1x32xf32, #tpu.memory_space<vmem>>, %arg4: memref<32x384xbf16, #tpu.memory_space<vmem>>, %arg5: memref<128x32xbf16, #tpu.memory_space<vmem>>, %arg6: memref<1x8x32xf32, #tpu.memory_space<vmem>>) attributes {dimension_semantics = [#tpu.dimension_semantics<parallel>], iteration_bounds = array<i64: 2>, scalar_prefetch = 0 : i64, scratch_operands = 0 : i64, tpu.core_type = #tpu.core_type<tc>, window_params = [{transform_indices = @transform_0, window_bounds = array<i64: 1, 8, 32>}, {pipeline_mode = #tpu.pipeline_mode<synchronous>, transform_indices = @transform_1, window_bounds = array<i64: 1, 32>}, {pipeline_mode = #tpu.pipeline_mode<synchronous>, transform_indices = @transform_2, window_bounds = array<i64: 1, 32>}, {pipeline_mode = #tpu.pipeline_mode<synchronous>, transform_indices = @transform_3, window_bounds = array<i64: 32, 384>}, {pipeline_mode = #tpu.pipeline_mode<synchronous>, transform_indices = @transform_4, window_bounds = array<i64: 128, 32>}, {transform_indices = @transform_5, window_bounds = array<i64: 1, 8, 32>}]} {
    %c0 = arith.constant 0 : index
    %c0_0 = arith.constant 0 : index
    %c0_1 = arith.constant 0 : index
    %0 = vector.load %arg1[%c0, %c0_0, %c0_1] : memref<1x8x32xf32, #tpu.memory_space<vmem>>, vector<1x8x32xf32>
    %cst = arith.constant dense<0.000000e+00> : vector<1x8xf32>
    %1 = vector.multi_reduction <add>, %0, %cst [2] : vector<1x8x32xf32> to vector<1x8xf32>
    %2 = vector.shape_cast %1 : vector<1x8xf32> to vector<1x8x1xf32>
    %cst_2 = arith.constant 3.200000e+01 : f32
    %3 = vector.broadcast %cst_2 : f32 to vector<1x8x1xf32>
    %4 = arith.divf %2, %3 : vector<1x8x1xf32>
    %5 = vector.broadcast %4 : vector<1x8x1xf32> to vector<1x8x32xf32>
    %6 = arith.subf %0, %5 : vector<1x8x32xf32>
    %7 = arith.mulf %6, %6 : vector<1x8x32xf32>
    %cst_3 = arith.constant dense<0.000000e+00> : vector<1x8xf32>
    %8 = vector.multi_reduction <add>, %7, %cst_3 [2] : vector<1x8x32xf32> to vector<1x8xf32>
    %9 = vector.shape_cast %8 : vector<1x8xf32> to vector<1x8x1xf32>
    %cst_4 = arith.constant 3.200000e+01 : f32
    %10 = vector.broadcast %cst_4 : f32 to vector<1x8x1xf32>
    %11 = arith.divf %9, %10 : vector<1x8x1xf32>
    %12 = vector.broadcast %4 : vector<1x8x1xf32> to vector<1x8x32xf32>
    %13 = arith.subf %0, %12 : vector<1x8x32xf32>
    %cst_5 = arith.constant 9.99999974E-6 : f32
    %14 = vector.broadcast %cst_5 : f32 to vector<1x8x1xf32>
    %15 = arith.addf %11, %14 : vector<1x8x1xf32>
    %16 = math.rsqrt %15 : vector<1x8x1xf32>
    %17 = vector.broadcast %16 : vector<1x8x1xf32> to vector<1x8x32xf32>
    %18 = arith.mulf %13, %17 : vector<1x8x32xf32>
    %c0_6 = arith.constant 0 : index
    %c0_7 = arith.constant 0 : index
    %19 = vector.load %arg2[%c0_6, %c0_7] : memref<1x32xf32, #tpu.memory_space<vmem>>, vector<1x32xf32>
    %20 = vector.shape_cast %19 : vector<1x32xf32> to vector<32xf32>
    %21 = vector.shape_cast %20 : vector<32xf32> to vector<1x1x32xf32>
    %22 = vector.broadcast %21 : vector<1x1x32xf32> to vector<1x8x32xf32>
    %23 = arith.mulf %18, %22 : vector<1x8x32xf32>
    %c0_8 = arith.constant 0 : index
    %c0_9 = arith.constant 0 : index
    %24 = vector.load %arg3[%c0_8, %c0_9] : memref<1x32xf32, #tpu.memory_space<vmem>>, vector<1x32xf32>
    %25 = vector.shape_cast %24 : vector<1x32xf32> to vector<32xf32>
    %26 = vector.shape_cast %25 : vector<32xf32> to vector<1x1x32xf32>
    %27 = vector.broadcast %26 : vector<1x1x32xf32> to vector<1x8x32xf32>
    %28 = arith.addf %23, %27 : vector<1x8x32xf32>
    %29 = arith.truncf %28 : vector<1x8x32xf32> to vector<1x8x32xbf16>
    %30 = vector.shape_cast %29 : vector<1x8x32xbf16> to vector<8x32xbf16>
    %c0_10 = arith.constant 0 : index
    %c0_11 = arith.constant 0 : index
    %31 = vector.load %arg4[%c0_10, %c0_11] : memref<32x384xbf16, #tpu.memory_space<vmem>>, vector<32x384xbf16>
    %cst_12 = arith.constant dense<0.000000e+00> : vector<8x384xf32>
    %32 = tpu.matmul %30, %31, %cst_12 {dimension_numbers = #tpu.dot_dimension_numbers<[1], [0], [0], [1], [0, 0, 1, 1], [], []>} : vector<8x32xbf16>, vector<32x384xbf16>, vector<8x384xf32> -> vector<8x384xf32>
    %33 = vector.shape_cast %32 : vector<8x384xf32> to vector<1x8x384xf32>
    %cst_13 = arith.constant 0.000000e+00 : f32
    %34 = vector.broadcast %cst_13 : f32 to vector<8x32xf32>
    %35 = vector.extract_strided_slice %33 {offsets = [0, 0, 0], sizes = [1, 8, 64], strides = [1, 1, 1]} : vector<1x8x384xf32> to vector<1x8x64xf32>
    %36 = vector.extract_strided_slice %33 {offsets = [0, 0, 128], sizes = [1, 8, 64], strides = [1, 1, 1]} : vector<1x8x384xf32> to vector<1x8x64xf32>
    %37 = vector.extract_strided_slice %33 {offsets = [0, 0, 256], sizes = [1, 8, 64], strides = [1, 1, 1]} : vector<1x8x384xf32> to vector<1x8x64xf32>
    "tpu.trace_start"() <{level = 10 : i32, message = "bqd,bkd->bqk"}> : () -> ()
    %cst_14 = arith.constant dense<0.000000e+00> : vector<1x8x8xf32>
    %38 = tpu.matmul %35, %36, %cst_14 {dimension_numbers = #tpu.dot_dimension_numbers<[2], [2], [1], [1], [0, 0, 0, 1, 1, 1], [0], [0]>} : vector<1x8x64xf32>, vector<1x8x64xf32>, vector<1x8x8xf32> -> vector<1x8x8xf32>
    "tpu.trace_stop"() : () -> ()
    %cst_15 = arith.constant dense<0xFF800000> : vector<1x8xf32>
    %39 = vector.multi_reduction <maximumf>, %38, %cst_15 [2] : vector<1x8x8xf32> to vector<1x8xf32>
    %40 = vector.shape_cast %39 : vector<1x8xf32> to vector<1x8x1xf32>
    %41 = vector.broadcast %40 : vector<1x8x1xf32> to vector<1x8x8xf32>
    %42 = arith.subf %38, %41 : vector<1x8x8xf32>
    %43 = math.exp %42 : vector<1x8x8xf32>
    %cst_16 = arith.constant dense<0.000000e+00> : vector<1x8xf32>
    %44 = vector.multi_reduction <add>, %43, %cst_16 [2] : vector<1x8x8xf32> to vector<1x8xf32>
    %45 = vector.shape_cast %44 : vector<1x8xf32> to vector<1x8x1xf32>
    "tpu.trace_start"() <{level = 10 : i32, message = "bqk,bkd->bqd"}> : () -> ()
    %cst_17 = arith.constant dense<0.000000e+00> : vector<1x8x64xf32>
    %46 = tpu.matmul %43, %37, %cst_17 {dimension_numbers = #tpu.dot_dimension_numbers<[2], [1], [1], [2], [0, 0, 0, 1, 1, 2], [0], [0]>} : vector<1x8x8xf32>, vector<1x8x64xf32>, vector<1x8x64xf32> -> vector<1x8x64xf32>
    "tpu.trace_stop"() : () -> ()
    %47 = tpu.reciprocal %45 {approx = true} : vector<1x8x1xf32> -> vector<1x8x1xf32>
    %48 = vector.broadcast %47 : vector<1x8x1xf32> to vector<1x8x64xf32>
    %49 = arith.mulf %46, %48 : vector<1x8x64xf32>
    %50 = vector.shape_cast %49 : vector<1x8x64xf32> to vector<8x64xf32>
    %51 = arith.truncf %50 : vector<8x64xf32> to vector<8x64xbf16>
    %c0_18 = arith.constant 0 : index
    %c0_19 = arith.constant 0 : index
    %52 = vector.load %arg5[%c0_18, %c0_19] : memref<128x32xbf16, #tpu.memory_space<vmem>>, vector<64x32xbf16>
    %cst_20 = arith.constant dense<0.000000e+00> : vector<8x32xf32>
    %53 = tpu.matmul %51, %52, %cst_20 {dimension_numbers = #tpu.dot_dimension_numbers<[1], [0], [0], [1], [0, 0, 1, 1], [], []>} : vector<8x64xbf16>, vector<64x32xbf16>, vector<8x32xf32> -> vector<8x32xf32>
    %54 = arith.addf %34, %53 : vector<8x32xf32>
    %55 = vector.extract_strided_slice %33 {offsets = [0, 0, 64], sizes = [1, 8, 64], strides = [1, 1, 1]} : vector<1x8x384xf32> to vector<1x8x64xf32>
    %56 = vector.extract_strided_slice %33 {offsets = [0, 0, 192], sizes = [1, 8, 64], strides = [1, 1, 1]} : vector<1x8x384xf32> to vector<1x8x64xf32>
    %57 = vector.extract_strided_slice %33 {offsets = [0, 0, 320], sizes = [1, 8, 64], strides = [1, 1, 1]} : vector<1x8x384xf32> to vector<1x8x64xf32>
    "tpu.trace_start"() <{level = 10 : i32, message = "bqd,bkd->bqk"}> : () -> ()
    %cst_21 = arith.constant dense<0.000000e+00> : vector<1x8x8xf32>
    %58 = tpu.matmul %55, %56, %cst_21 {dimension_numbers = #tpu.dot_dimension_numbers<[2], [2], [1], [1], [0, 0, 0, 1, 1, 1], [0], [0]>} : vector<1x8x64xf32>, vector<1x8x64xf32>, vector<1x8x8xf32> -> vector<1x8x8xf32>
    "tpu.trace_stop"() : () -> ()
    %cst_22 = arith.constant dense<0xFF800000> : vector<1x8xf32>
    %59 = vector.multi_reduction <maximumf>, %58, %cst_22 [2] : vector<1x8x8xf32> to vector<1x8xf32>
    %60 = vector.shape_cast %59 : vector<1x8xf32> to vector<1x8x1xf32>
    %61 = vector.broadcast %60 : vector<1x8x1xf32> to vector<1x8x8xf32>
    %62 = arith.subf %58, %61 : vector<1x8x8xf32>
    %63 = math.exp %62 : vector<1x8x8xf32>
    %cst_23 = arith.constant dense<0.000000e+00> : vector<1x8xf32>
    %64 = vector.multi_reduction <add>, %63, %cst_23 [2] : vector<1x8x8xf32> to vector<1x8xf32>
    %65 = vector.shape_cast %64 : vector<1x8xf32> to vector<1x8x1xf32>
    "tpu.trace_start"() <{level = 10 : i32, message = "bqk,bkd->bqd"}> : () -> ()
    %cst_24 = arith.constant dense<0.000000e+00> : vector<1x8x64xf32>
    %66 = tpu.matmul %63, %57, %cst_24 {dimension_numbers = #tpu.dot_dimension_numbers<[2], [1], [1], [2], [0, 0, 0, 1, 1, 2], [0], [0]>} : vector<1x8x8xf32>, vector<1x8x64xf32>, vector<1x8x64xf32> -> vector<1x8x64xf32>
    "tpu.trace_stop"() : () -> ()
    %67 = tpu.reciprocal %65 {approx = true} : vector<1x8x1xf32> -> vector<1x8x1xf32>
    %68 = vector.broadcast %67 : vector<1x8x1xf32> to vector<1x8x64xf32>
    %69 = arith.mulf %66, %68 : vector<1x8x64xf32>
    %70 = vector.shape_cast %69 : vector<1x8x64xf32> to vector<8x64xf32>
    %71 = arith.truncf %70 : vector<8x64xf32> to vector<8x64xbf16>
    %c64 = arith.constant 64 : index
    %c0_25 = arith.constant 0 : index
    %72 = vector.load %arg5[%c64, %c0_25] : memref<128x32xbf16, #tpu.memory_space<vmem>>, vector<64x32xbf16>
    %cst_26 = arith.constant dense<0.000000e+00> : vector<8x32xf32>
    %73 = tpu.matmul %71, %72, %cst_26 {dimension_numbers = #tpu.dot_dimension_numbers<[1], [0], [0], [1], [0, 0, 1, 1], [], []>} : vector<8x64xbf16>, vector<64x32xbf16>, vector<8x32xf32> -> vector<8x32xf32>
    %74 = arith.addf %54, %73 : vector<8x32xf32>
    %75 = vector.shape_cast %74 : vector<8x32xf32> to vector<1x8x32xf32>
    %c0_27 = arith.constant 0 : index
    %c0_28 = arith.constant 0 : index
    %c0_29 = arith.constant 0 : index
    %76 = vector.load %arg6[%c0_27, %c0_28, %c0_29] : memref<1x8x32xf32, #tpu.memory_space<vmem>>, vector<1x8x32xf32>
    tpu.vector_store %arg6[%c0_27, %c0_28, %c0_29], %75 {strides = array<i32>} : memref<1x8x32xf32, #tpu.memory_space<vmem>>, vector<1x8x32xf32>,
    return
  }
  func.func @transform_0(%arg0: i32) -> (i32, i32, i32) {
    %c0_i32 = arith.constant 0 : i32
    %c0_i32_0 = arith.constant 0 : i32
    %c0_i32_1 = arith.constant 0 : i32
    return %arg0, %c0_i32, %c0_i32_0 : i32, i32, i32
  }
  func.func @transform_1(%arg0: i32) -> (i32, i32) {
    %c0_i32 = arith.constant 0 : i32
    %c0_i32_0 = arith.constant 0 : i32
    %c0_i32_1 = arith.constant 0 : i32
    return %c0_i32, %c0_i32_0 : i32, i32
  }
  func.func @transform_2(%arg0: i32) -> (i32, i32) {
    %c0_i32 = arith.constant 0 : i32
    %c0_i32_0 = arith.constant 0 : i32
    %c0_i32_1 = arith.constant 0 : i32
    return %c0_i32, %c0_i32_0 : i32, i32
  }
  func.func @transform_3(%arg0: i32) -> (i32, i32) {
    %c0_i32 = arith.constant 0 : i32
    %c0_i32_0 = arith.constant 0 : i32
    %c0_i32_1 = arith.constant 0 : i32
    return %c0_i32, %c0_i32_0 : i32, i32
  }
  func.func @transform_4(%arg0: i32) -> (i32, i32) {
    %c0_i32 = arith.constant 0 : i32
    %c0_i32_0 = arith.constant 0 : i32
    %c0_i32_1 = arith.constant 0 : i32
    return %c0_i32, %c0_i32_0 : i32, i32
  }
  func.func @transform_5(%arg0: i32) -> (i32, i32, i32) {
    %c0_i32 = arith.constant 0 : i32
    %c0_i32_0 = arith.constant 0 : i32
    %c0_i32_1 = arith.constant 0 : i32
    return %arg0, %c0_i32, %c0_i32_0 : i32, i32, i32
  }
}

</mosaic_0001>

<llo_original>
// kernel: tpu_custom_call.1
$region0: #{tpu_custom_call.1}
  #allocation0 [shape = 'u32[]', space=smem, size = 0x4, offset = 0x4, fixed_abs, tag = 'smem constant byte address 0x4 - core index']
  #allocation1 [shape = 'u32[144,128]{1,0:T(1,128)}', space=vmem, size = 0x12000, scoped, tag = 'internal scratch']
  %s0 = inlined_call_operand.vmem [shape: f32[2,8,32], index: 0, kind: input, shape index: {}]
  %s1 = inlined_call_operand.vmem [shape: f32[1,32], index: 1, kind: input, shape index: {}]
  %s2 = inlined_call_operand.vmem [shape: f32[1,32], index: 2, kind: input, shape index: {}]
  %s3 = inlined_call_operand.vmem [shape: bf16[32,384], index: 3, kind: input, shape index: {}]
  %s4 = inlined_call_operand.vmem [shape: bf16[128,32], index: 4, kind: input, shape index: {}]
  %s5 = inlined_call_operand.hbm [shape: f32[2,8,32], index: 5, kind: output, shape index: {}]
  %s6 = sld [smem:[#allocation0]]
  $region53: #{tpu_custom_call.1} parent=0
    _
  %s8 = ssub.s32 1, %s6
  %s9 = scalar_select 0, %s8, %s6
  $region1: #{tpu_custom_call.1} parent=0
    #allocation2 [shape = 'u8[8192]{0}', space=vmem, size = 0x2000, scoped, tag = 'output window, operand 0']
    #allocation3 [shape = 's32[2]{0}', space=sflag, size = 0x8, scoped, tag = 'scoped memory for tpu_custom_call.1']
    %10 = vsyncpa [#allocation3], 0
    %s11 = scalar_lea.sflag [#allocation3], 1
    %12 = vsyncpa %s11, 0
    loop: start=0, step=1, limit=4
    $region2: #{tpu_custom_call.1} parent=1 // loop_pre_header
      _
    $region3: #{tpu_custom_call.1} parent=1 // loop_header
      %s14 = sphi 0, %s18
      %p15 = scmp.ge.s32.totalorder %s14, 4
      %s24 = sphi 0, %s26
      %s27 = sphi 0, %s24
      %s28 = sphi 0, %s27
      %s44 = sphi 0, %s28
      %s48 = sphi 0, %s48
      %s50 = sphi 0, %s48
      %s51 = sphi 0, %s50
      %s65 = sphi 0, %s51
      %s69 = sphi 0, %s69
      %s71 = sphi 0, %s69
      %s72 = sphi 0, %s71
      %s86 = sphi 0, %s72
      %s90 = sphi 0, %s90
      %s92 = sphi 0, %s90
      %s93 = sphi 0, %s92
      %s107 = sphi 0, %s93
      %s111 = sphi 0, %s111
      %s113 = sphi 0, %s111
      %s114 = sphi 0, %s113
      %s128 = sphi 0, %s114
      %s134 = sphi 0, %s136
      %s137 = sphi 0, %s134
      %s138 = sphi 0, %s137
      %s154 = sphi 0, %s138
    $region4: #{tpu_custom_call.1} parent=1 // loop_header_branch
      %17 = sbr.rel (%p15) target = $region8
    $region5: #{tpu_custom_call.1} parent=1 // loop_body
      %s19 = ssub.s32 %s14, 1
      %s20 = ssub.s32 %s14, 2
      %s21 = sadd.s32 %s14, 1
      %s22 = ssub.s32 %s14, %s21
      %p23 = scmp.eq.s32.totalorder %s22, 0
      %s25 = sadd.s32 %s24, 1
      %s26 = scalar_select %p23, %s24, %s25
      %p29 = pneg %p23
      %p30 = scmp.eq.s32.totalorder %s14, 1
      %p31 = por %p29, %p30
      %p32 = scmp.ne.s32.totalorder %s24, %s27
      %p33 = scmp.eq.s32.totalorder %s14, 0
      %p34 = por %p32, %p33
      %p35 = scmp.ne.s32.totalorder %s24, %s27
      %p36 = scmp.eq.s32.totalorder %s19, 1
      %p37 = por %p35, %p36
      %p38 = scmp.ne.s32.totalorder %s27, %s28
      %p39 = scmp.eq.s32.totalorder %s19, 0
      %p40 = por %p38, %p39
      %p41 = scmp.ne.s32.totalorder %s27, %s28
      %p42 = scmp.eq.s32.totalorder %s20, 1
      %p43 = por %p41, %p42
      %p45 = scmp.ne.s32.totalorder %s28, %s44
      %p46 = scmp.eq.s32.totalorder %s20, 0
      %p47 = por %p45, %p46
      %s49 = sadd.s32 %s48, 1
      %p52 = scmp.eq.s32.totalorder %s14, 1
      %p53 = scmp.ne.s32.totalorder %s48, %s50
      %p54 = scmp.eq.s32.totalorder %s14, 0
      %p55 = por %p53, %p54
      %p56 = scmp.ne.s32.totalorder %s48, %s50
      %p57 = scmp.eq.s32.totalorder %s19, 1
      %p58 = por %p56, %p57
      %p59 = scmp.ne.s32.totalorder %s50, %s51
      %p60 = scmp.eq.s32.totalorder %s19, 0
      %p61 = por %p59, %p60
      %p62 = scmp.ne.s32.totalorder %s50, %s51
      %p63 = scmp.eq.s32.totalorder %s20, 1
      %p64 = por %p62, %p63
      %p66 = scmp.ne.s32.totalorder %s51, %s65
      %p67 = scmp.eq.s32.totalorder %s20, 0
      %p68 = por %p66, %p67
      %s70 = sadd.s32 %s69, 1
      %p73 = scmp.eq.s32.totalorder %s14, 1
      %p74 = scmp.ne.s32.totalorder %s69, %s71
      %p75 = scmp.eq.s32.totalorder %s14, 0
      %p76 = por %p74, %p75
      %p77 = scmp.ne.s32.totalorder %s69, %s71
      %p78 = scmp.eq.s32.totalorder %s19, 1
      %p79 = por %p77, %p78
      %p80 = scmp.ne.s32.totalorder %s71, %s72
      %p81 = scmp.eq.s32.totalorder %s19, 0
      %p82 = por %p80, %p81
      %p83 = scmp.ne.s32.totalorder %s71, %s72
      %p84 = scmp.eq.s32.totalorder %s20, 1
      %p85 = por %p83, %p84
      %p87 = scmp.ne.s32.totalorder %s72, %s86
      %p88 = scmp.eq.s32.totalorder %s20, 0
      %p89 = por %p87, %p88
      %s91 = sadd.s32 %s90, 1
      %p94 = scmp.eq.s32.totalorder %s14, 1
      %p95 = scmp.ne.s32.totalorder %s90, %s92
      %p96 = scmp.eq.s32.totalorder %s14, 0
      %p97 = por %p95, %p96
      %p98 = scmp.ne.s32.totalorder %s90, %s92
      %p99 = scmp.eq.s32.totalorder %s19, 1
      %p100 = por %p98, %p99
      %p101 = scmp.ne.s32.totalorder %s92, %s93
      %p102 = scmp.eq.s32.totalorder %s19, 0
      %p103 = por %p101, %p102
      %p104 = scmp.ne.s32.totalorder %s92, %s93
      %p105 = scmp.eq.s32.totalorder %s20, 1
      %p106 = por %p104, %p105
      %p108 = scmp.ne.s32.totalorder %s93, %s107
      %p109 = scmp.eq.s32.totalorder %s20, 0
      %p110 = por %p108, %p109
      %s112 = sadd.s32 %s111, 1
      %p115 = scmp.eq.s32.totalorder %s14, 1
      %p116 = scmp.ne.s32.totalorder %s111, %s113
      %p117 = scmp.eq.s32.totalorder %s14, 0
      %p118 = por %p116, %p117
      %p119 = scmp.ne.s32.totalorder %s111, %s113
      %p120 = scmp.eq.s32.totalorder %s19, 1
      %p121 = por %p119, %p120
      %p122 = scmp.ne.s32.totalorder %s113, %s114
      %p123 = scmp.eq.s32.totalorder %s19, 0
      %p124 = por %p122, %p123
      %p125 = scmp.ne.s32.totalorder %s113, %s114
      %p126 = scmp.eq.s32.totalorder %s20, 1
      %p127 = por %p125, %p126
      %p129 = scmp.ne.s32.totalorder %s114, %s128
      %p130 = scmp.eq.s32.totalorder %s20, 0
      %p131 = por %p129, %p130
      %s132 = ssub.s32 %s14, %s21
      %p133 = scmp.eq.s32.totalorder %s132, 0
      %s135 = sadd.s32 %s134, 1
      %s136 = scalar_select %p133, %s134, %s135
      %p139 = pneg %p133
      %p140 = scmp.eq.s32.totalorder %s14, 1
      %p141 = por %p139, %p140
      %p142 = scmp.ne.s32.totalorder %s134, %s137
      %p143 = scmp.eq.s32.totalorder %s14, 0
      %p144 = por %p142, %p143
      %p145 = scmp.ne.s32.totalorder %s134, %s137
      %p146 = scmp.eq.s32.totalorder %s19, 1
      %p147 = por %p145, %p146
      %p148 = scmp.ne.s32.totalorder %s137, %s138
      %p149 = scmp.eq.s32.totalorder %s19, 0
      %p150 = por %p148, %p149
      %p151 = scmp.ne.s32.totalorder %s137, %s138
      %p152 = scmp.eq.s32.totalorder %s20, 1
      %p153 = por %p151, %p152
      %p155 = scmp.ne.s32.totalorder %s138, %s154
      %p156 = scmp.eq.s32.totalorder %s20, 0
      %p157 = por %p155, %p156
      %p158 = scmp.le.s32.totalorder 1, %s14
      %p159 = scmp.lt.s32.totalorder %s14, 3
      %p160 = pnand %p158, %p159
      %p161 = pneg %p160
      // Predicated region
      $region9: #{tpu_custom_call.1} parent=5 // pred_check
        _
      $region10: #{tpu_custom_call.1} parent=5 // pred_check_branch
        %163 = sbr.rel (%p160) target = $region12
      $region11: #{tpu_custom_call.1} parent=5 // pred_region
        %s164 = ssub.s32 %s14, 1
        // Predicated region
        $region13: #{tpu_custom_call.1} parent=11 // pred_check
          %p165 = pneg %p61
        $region14: #{tpu_custom_call.1} parent=11 // pred_check_branch
          %167 = sbr.rel (%p165) target = $region16
        $region15: #{tpu_custom_call.1} parent=11 // pred_region
          _
        $region16: #{tpu_custom_call.1} parent=11 // pred_fallthru
          _
        // Predicated region
        $region17: #{tpu_custom_call.1} parent=11 // pred_check
          %p168 = pneg %p82
        $region18: #{tpu_custom_call.1} parent=11 // pred_check_branch
          %170 = sbr.rel (%p168) target = $region20
        $region19: #{tpu_custom_call.1} parent=11 // pred_region
          _
        $region20: #{tpu_custom_call.1} parent=11 // pred_fallthru
          _
        // Predicated region
        $region21: #{tpu_custom_call.1} parent=11 // pred_check
          %p171 = pneg %p103
        $region22: #{tpu_custom_call.1} parent=11 // pred_check_branch
          %173 = sbr.rel (%p171) target = $region24
        $region23: #{tpu_custom_call.1} parent=11 // pred_region
          _
        $region24: #{tpu_custom_call.1} parent=11 // pred_fallthru
          _
        // Predicated region
        $region25: #{tpu_custom_call.1} parent=11 // pred_check
          %p174 = pneg %p124
        $region26: #{tpu_custom_call.1} parent=11 // pred_check_branch
          %176 = sbr.rel (%p174) target = $region28
        $region27: #{tpu_custom_call.1} parent=11 // pred_region
          _
        $region28: #{tpu_custom_call.1} parent=11 // pred_fallthru
          _
      $region12: #{tpu_custom_call.1} parent=5 // pred_fallthru
        _
      %p177 = scmp.lt.s32.totalorder %s14, 2
      // Predicated region
      $region29: #{tpu_custom_call.1} parent=5 // pred_check
        %p178 = pneg %p177
      $region30: #{tpu_custom_call.1} parent=5 // pred_check_branch
        %180 = sbr.rel (%p178) target = $region32
      $region31: #{tpu_custom_call.1} parent=5 // pred_region
        // Predicated region
        $region33: #{tpu_custom_call.1} parent=31 // pred_check
          %p181 = pneg %p34
        $region34: #{tpu_custom_call.1} parent=31 // pred_check_branch
          %183 = sbr.rel (%p181) target = $region36
        $region35: #{tpu_custom_call.1} parent=31 // pred_region
          %p184 = scmp.lt.s32.totalorder %s14, 1
          %s185 = scalar_select %p184, %s14, 1
          %s186 = smul.addr %s185, 8
          %s187 = scalar_lea.vmem %s0, %s186
        $region36: #{tpu_custom_call.1} parent=31 // pred_fallthru
          _
      $region32: #{tpu_custom_call.1} parent=5 // pred_fallthru
        _
      %p188 = scmp.le.s32.totalorder 1, %s14
      %p189 = scmp.lt.s32.totalorder %s14, 3
      %p190 = pnand %p188, %p189
      %p191 = pneg %p190
      // Predicated region
      $region37: #{tpu_custom_call.1} parent=5 // pred_check
        _
      $region38: #{tpu_custom_call.1} parent=5 // pred_check_branch
        %193 = sbr.rel (%p190) target = $region40
      $region39: #{tpu_custom_call.1} parent=5 // pred_region
        %s194 = ssub.s32 %s14, 1
        %p195 = scmp.lt.s32.totalorder %s19, 1
        %s196 = scalar_select %p195, %s19, 1
        %s197 = smul.addr %s196, 8
        %s198 = scalar_lea.vmem %s0, %s197
        %p199 = pneg %p40
        %p200 = pneg %p37
        %p201 = pneg %p61
        %p202 = pneg %p58
        %p203 = pneg %p82
        %p204 = pneg %p79
        %p205 = pneg %p103
        %p206 = pneg %p100
        %p207 = pneg %p124
        %p208 = pneg %p121
        %p209 = pneg %p150
        %p210 = pneg %p147
        %s211 = sand.u32 %s137, 1
        %s212 = scalar_lea.sflag [#allocation3], %s211
        %s213 = sand.u32 %s137, 1
        %s214 = smul.addr %s213, 8
        %s215 = scalar_lea.vmem [#allocation2], %s214
        %p216 = scmp.lt.s32.totalorder %s19, 1
        %s217 = scalar_select %p216, %s19, 1
        %s218 = smul.addr %s217, 8
        %s219 = scalar_lea.vmem %s0, %s218
        %v221 = vld [vmem:[%s219] sm:$0xff]
        %vm222 = vcmask 261120
        %v223 = vsel %vm222, %v221, 0.0
        %224 = vadd.xlane.f32.xlu0 %v223
        %v225 = vpop.xlane.xlu0 %224
        %v226 = vrcp.pop 32.0
        %v227 = vmul.f32 %v225, %v226
        %v228 = vsub.f32 %v221, %v227
        %v229 = vmul.f32 %v228, %v228
        %v230 = vsel %vm222, %v229, 0.0
        %231 = vadd.xlane.f32.xlu0 %v230
        %v232 = vpop.xlane.xlu0 %231
        %v233 = vmul.f32 %v232, %v226
        %v234 = vadd.f32 %v233, 1e-05
        %v235 = vrsqrt.pop %v234
        %v236 = vmul.f32 %v228, %v235
        %v237 = vld [vmem:[%s1] sm:$0x1]
        %v239 = vlaneseq
        %v240 = vshrl.u32 %v239, 7
        %v241 = vsub.s32 0, %v240
        %v242 = vrot.slane %v237, %v241
        %v244 = vmul.f32 %v236, %v242
        %v245 = vld [vmem:[%s2] sm:$0x1]
        %v247 = vlaneseq
        %v248 = vshrl.u32 %v247, 7
        %v249 = vsub.s32 0, %v248
        %v250 = vrot.slane %v245, %v249
        %v252 = vadd.f32 %v244, %v250
        %v253 = vpack.c.bf16 %v252, %v252
        %v254 = vld [vmem:[%s3] sm:$0xff]
        %v255 = vld [vmem:[%s3 + $0x8] sm:$0xf]
        %v256 = vld [vmem:[%s3 + $0xc] sm:$0xff]
        %v257 = vld [vmem:[%s3 + $0x14] sm:$0xf]
        %v258 = vld [vmem:[%s3 + $0x18] sm:$0xff]
        %v259 = vld [vmem:[%s3 + $0x20] sm:$0xf]
        %v260 = vld [vmem:[%s3 + $0x24] sm:$0xff]
        %v261 = vld [vmem:[%s3 + $0x2c] sm:$0xf]
        %v270 = vunpack.c.l.b16 %v254
        %v271 = vunpack.c.h.b16 %v254
        %v272 = vunpack.c.l.b16 %v255
        %v273 = vunpack.c.l.b16 %v256
        %v274 = vunpack.c.h.b16 %v256
        %v275 = vunpack.c.l.b16 %v257
        %v276 = vunpack.c.l.b16 %v258
        %v277 = vunpack.c.h.b16 %v258
        %v278 = vunpack.c.l.b16 %v259
        %v279 = vunpack.c.l.b16 %v260
        %v280 = vunpack.c.h.b16 %v260
        %v281 = vunpack.c.l.b16 %v261
        %v282 = vpack.c.b16 %v273, %v270
        %v283 = vpack.c.b16 %v274, %v271
        %v284 = vpack.c.b16 %v275, %v272
        %v285 = vpack.c.b16 %v279, %v276
        %v286 = vpack.c.b16 %v280, %v277
        %v287 = vpack.c.b16 %v281, %v278
        %v295 = vsel %vm222, %v253, 0
        %297 = vmatprep.subr.bf16.mxu0 0
        %298 = vmatpush1.bf16.msra.mxu0 0
        %299 = vmatprep.subr.bf16.mxu0 0
        %300 = vmatpush1.bf16.msra.mxu0 0
        %301 = vmatprep.subr.bf16.mxu0 0
        %302 = vmatpush1.bf16.msra.mxu0 0
        %303 = vmatprep.subr.bf16.mxu0 0
        %304 = vmatpush1.bf16.msra.mxu0 0
        %305 = vmatprep.subr.bf16.mxu0 0
        %306 = vmatpush1.bf16.msra.mxu0 0
        %307 = vmatprep.subr.bf16.mxu0 0
        %308 = vmatpush1.bf16.msra.mxu0 0
        %309 = vmatprep.subr.bf16.mxu0 %v286
        %310 = vmatpush1.bf16.msra.mxu0 %v285
        %311 = vmatprep.subr.bf16.mxu0 %v283
        %312 = vmatpush1.bf16.msra.mxu0 %v282
        %313 = vmatprep.subr.bf16.mxu0 0
        %314 = vmatpush2.bf16.msra.mxu0 0
        %315 = vmatprep.subr.bf16.mxu0 0
        %316 = vmatpush2.bf16.msra.mxu0 0
        %317 = vmatprep.subr.bf16.mxu0 0
        %318 = vmatpush2.bf16.msra.mxu0 0
        %319 = vmatprep.subr.bf16.mxu0 0
        %320 = vmatpush2.bf16.msra.mxu0 0
        %321 = vmatprep.subr.bf16.mxu0 0
        %322 = vmatpush2.bf16.msra.mxu0 0
        %323 = vmatprep.subr.bf16.mxu0 0
        %324 = vmatpush2.bf16.msra.mxu0 0
        %325 = vmatprep.subr.bf16.mxu0 0
        %326 = vmatpush2.bf16.msra.mxu0 0
        %327 = vmatprep.subr.bf16.mxu0 0
        %328 = vmatpush2.bf16.msra.mxu0 0
        %329 = vmatprep.mubr.bf16.mxu0 0
        %330 = vmatmul.mubr.bf16.gmra.mxu0 %v295
        %v331 = vpop.f32.mrf.mxu0
        %v332 = vadd.f32 0.0, %v331
        %v333 = vpop.f32.mrf.mxu0
        %v334 = vadd.f32 0.0, %v333
        %v335 = vpop.f32.mrf.mxu0
        %v336 = vpop.f32.mrf.mxu0
        %337 = vdwg.mxu0
        %338 = vmatprep.subr.bf16.mxu0 0
        %339 = vmatpush1.bf16.msra.mxu0 0
        %340 = vmatprep.subr.bf16.mxu0 0
        %341 = vmatpush1.bf16.msra.mxu0 0
        %342 = vmatprep.subr.bf16.mxu0 0
        %343 = vmatpush1.bf16.msra.mxu0 0
        %344 = vmatprep.subr.bf16.mxu0 0
        %345 = vmatpush1.bf16.msra.mxu0 0
        %346 = vmatprep.subr.bf16.mxu0 0
        %347 = vmatpush1.bf16.msra.mxu0 0
        %348 = vmatprep.subr.bf16.mxu0 0
        %349 = vmatpush1.bf16.msra.mxu0 0
        %350 = vmatprep.subr.bf16.mxu0 0
        %351 = vmatpush1.bf16.msra.mxu0 %v287
        %352 = vmatprep.subr.bf16.mxu0 0
        %353 = vmatpush1.bf16.msra.mxu0 %v284
        %354 = vmatprep.subr.bf16.mxu0 0
        %355 = vmatpush2.bf16.msra.mxu0 0
        %356 = vmatprep.subr.bf16.mxu0 0
        %357 = vmatpush2.bf16.msra.mxu0 0
        %358 = vmatprep.subr.bf16.mxu0 0
        %359 = vmatpush2.bf16.msra.mxu0 0
        %360 = vmatprep.subr.bf16.mxu0 0
        %361 = vmatpush2.bf16.msra.mxu0 0
        %362 = vmatprep.subr.bf16.mxu0 0
        %363 = vmatpush2.bf16.msra.mxu0 0
        %364 = vmatprep.subr.bf16.mxu0 0
        %365 = vmatpush2.bf16.msra.mxu0 0
        %366 = vmatprep.subr.bf16.mxu0 0
        %367 = vmatpush2.bf16.msra.mxu0 0
        %368 = vmatprep.subr.bf16.mxu0 0
        %369 = vmatpush2.bf16.msra.mxu0 0
        %370 = vmatprep.mubr.bf16.mxu0 0
        %371 = vmatmul.mubr.bf16.gmra.mxu0 %v295
        %v372 = vpop.f32.mrf.mxu0
        %v373 = vadd.f32 0.0, %v372
        %v374 = vpop.f32.mrf.mxu0
        %v375 = vpop.f32.mrf.mxu0
        %v376 = vpop.f32.mrf.mxu0
        %377 = vdwg.mxu0
        %vm378 = vcmask 523264
        %v380 = vsel %vm378, %v332, 0
        %v383 = vsel %vm378, %v334, 0
        %385 = vmatprep.subr.mxu0 0.0
        %386 = vmatpush1.xpose.msra.mxu0 0.0
        %387 = vmatprep.subr.mxu0 0.0
        %388 = vmatpush1.xpose.msra.mxu0 0.0
        %389 = vmatprep.subr.mxu0 0.0
        %390 = vmatpush1.xpose.msra.mxu0 0.0
        %391 = vmatprep.subr.mxu0 0.0
        %392 = vmatpush1.xpose.msra.mxu0 0.0
        %393 = vmatprep.subr.mxu0 0.0
        %394 = vmatpush1.xpose.msra.mxu0 0.0
        %395 = vmatprep.subr.mxu0 0.0
        %396 = vmatpush1.xpose.msra.mxu0 0.0
        %397 = vmatprep.subr.mxu0 0.0
        %398 = vmatpush1.xpose.msra.mxu0 0.0
        %399 = vmatprep.subr.mxu0 0.0
        %400 = vmatpush1.xpose.msra.mxu0 0.0
        %401 = vmatprep.subr.mxu0 0.0
        %402 = vmatpush1.xpose.msra.mxu0 0.0
        %403 = vmatprep.subr.mxu0 0.0
        %404 = vmatpush1.xpose.msra.mxu0 0.0
        %405 = vmatprep.subr.mxu0 0.0
        %406 = vmatpush1.xpose.msra.mxu0 0.0
        %407 = vmatprep.subr.mxu0 0.0
        %408 = vmatpush1.xpose.msra.mxu0 0.0
        %409 = vmatprep.subr.mxu0 0.0
        %410 = vmatpush1.xpose.msra.mxu0 0.0
        %411 = vmatprep.subr.mxu0 0.0
        %412 = vmatpush1.xpose.msra.mxu0 0.0
        %413 = vmatprep.subr.mxu0 0.0
        %414 = vmatpush1.xpose.msra.mxu0 0.0
        %415 = vmatprep.subr.mxu0 0.0
        %416 = vmatpush1.xpose.msra.mxu0 %v383
        %417 = vmatprep.subr.mxu0 0.0
        %418 = vmatpush2.xpose.msra.mxu0 0.0
        %419 = vmatprep.subr.mxu0 0.0
        %420 = vmatpush2.xpose.msra.mxu0 0.0
        %421 = vmatprep.subr.mxu0 0.0
        %422 = vmatpush2.xpose.msra.mxu0 0.0
        %423 = vmatprep.subr.mxu0 0.0
        %424 = vmatpush2.xpose.msra.mxu0 0.0
        %425 = vmatprep.subr.mxu0 0.0
        %426 = vmatpush2.xpose.msra.mxu0 0.0
        %427 = vmatprep.subr.mxu0 0.0
        %428 = vmatpush2.xpose.msra.mxu0 0.0
        %429 = vmatprep.subr.mxu0 0.0
        %430 = vmatpush2.xpose.msra.mxu0 0.0
        %431 = vmatprep.subr.mxu0 0.0
        %432 = vmatpush2.xpose.msra.mxu0 0.0
        %433 = vmatprep.subr.mxu0 0.0
        %434 = vmatpush2.xpose.msra.mxu0 0.0
        %435 = vmatprep.subr.mxu0 0.0
        %436 = vmatpush2.xpose.msra.mxu0 0.0
        %437 = vmatprep.subr.mxu0 0.0
        %438 = vmatpush2.xpose.msra.mxu0 0.0
        %439 = vmatprep.subr.mxu0 0.0
        %440 = vmatpush2.xpose.msra.mxu0 0.0
        %441 = vmatprep.subr.mxu0 0.0
        %442 = vmatpush2.xpose.msra.mxu0 0.0
        %443 = vmatprep.subr.mxu0 0.0
        %444 = vmatpush2.xpose.msra.mxu0 0.0
        %445 = vmatprep.subr.mxu0 0.0
        %446 = vmatpush2.xpose.msra.mxu0 0.0
        %447 = vmatprep.subr.mxu0 0.0
        %448 = vmatpush2.xpose.msra.mxu0 0.0
        %449 = vmatprep.mubr.f32.mxu0 0.0
        %450 = vmatmul.mubr.f32.gmra.mxu0 %v380
        %v451 = vpop.f32.mrf.mxu0
        %v452 = vadd.f32 0.0, %v451
        %v453 = vpop.f32.mrf.mxu0
        %454 = vdwg.mxu0
        %vm455 = vcmask 64512
        %v456 = vsel %vm455, %v452, -inf
        %457 = vmax.xlane.f32.xlu0 %v456
        %v458 = vpop.xlane.xlu0 %457
        %v459 = vsub.f32 %v452, %v458
        %v460 = vmul.f32 %v459, 1.442695
        %v461 = vpow.pop %v460
        %v462 = vsel %vm455, %v461, 0.0
        %463 = vadd.xlane.f32.xlu0 %v462
        %v464 = vpop.xlane.xlu0 %463
        %v466 = vsel %vm455, %v461, 0
        %468 = vmatprep.subr.mxu0 0.0
        %469 = vmatpush1.msra.mxu0 0.0
        %470 = vmatprep.subr.mxu0 0.0
        %471 = vmatpush1.msra.mxu0 0.0
        %472 = vmatprep.subr.mxu0 0.0
        %473 = vmatpush1.msra.mxu0 0.0
        %474 = vmatprep.subr.mxu0 0.0
        %475 = vmatpush1.msra.mxu0 0.0
        %476 = vmatprep.subr.mxu0 0.0
        %477 = vmatpush1.msra.mxu0 0.0
        %478 = vmatprep.subr.mxu0 0.0
        %479 = vmatpush1.msra.mxu0 0.0
        %480 = vmatprep.subr.mxu0 0.0
        %481 = vmatpush1.msra.mxu0 0.0
        %482 = vmatprep.subr.mxu0 0.0
        %483 = vmatpush1.msra.mxu0 0.0
        %484 = vmatprep.subr.mxu0 0.0
        %485 = vmatpush1.msra.mxu0 0.0
        %486 = vmatprep.subr.mxu0 0.0
        %487 = vmatpush1.msra.mxu0 0.0
        %488 = vmatprep.subr.mxu0 0.0
        %489 = vmatpush1.msra.mxu0 0.0
        %490 = vmatprep.subr.mxu0 0.0
        %491 = vmatpush1.msra.mxu0 0.0
        %492 = vmatprep.subr.mxu0 0.0
        %493 = vmatpush1.msra.mxu0 0.0
        %494 = vmatprep.subr.mxu0 0.0
        %495 = vmatpush1.msra.mxu0 0.0
        %496 = vmatprep.subr.mxu0 0.0
        %497 = vmatpush1.msra.mxu0 0.0
        %498 = vmatprep.subr.mxu0 0.0
        %499 = vmatpush1.msra.mxu0 %v373
        %500 = vmatprep.subr.mxu0 0.0
        %501 = vmatpush2.msra.mxu0 0.0
        %502 = vmatprep.subr.mxu0 0.0
        %503 = vmatpush2.msra.mxu0 0.0
        %504 = vmatprep.subr.mxu0 0.0
        %505 = vmatpush2.msra.mxu0 0.0
        %506 = vmatprep.subr.mxu0 0.0
        %507 = vmatpush2.msra.mxu0 0.0
        %508 = vmatprep.subr.mxu0 0.0
        %509 = vmatpush2.msra.mxu0 0.0
        %510 = vmatprep.subr.mxu0 0.0
        %511 = vmatpush2.msra.mxu0 0.0
        %512 = vmatprep.subr.mxu0 0.0
        %513 = vmatpush2.msra.mxu0 0.0
        %514 = vmatprep.subr.mxu0 0.0
        %515 = vmatpush2.msra.mxu0 0.0
        %516 = vmatprep.subr.mxu0 0.0
        %517 = vmatpush2.msra.mxu0 0.0
        %518 = vmatprep.subr.mxu0 0.0
        %519 = vmatpush2.msra.mxu0 0.0
        %520 = vmatprep.subr.mxu0 0.0
        %521 = vmatpush2.msra.mxu0 0.0
        %522 = vmatprep.subr.mxu0 0.0
        %523 = vmatpush2.msra.mxu0 0.0
        %524 = vmatprep.subr.mxu0 0.0
        %525 = vmatpush2.msra.mxu0 0.0
        %526 = vmatprep.subr.mxu0 0.0
        %527 = vmatpush2.msra.mxu0 0.0
        %528 = vmatprep.subr.mxu0 0.0
        %529 = vmatpush2.msra.mxu0 0.0
        %530 = vmatprep.subr.mxu0 0.0
        %531 = vmatpush2.msra.mxu0 0.0
        %532 = vmatprep.mubr.f32.mxu0 0.0
        %533 = vmatmul.mubr.f32.gmra.mxu0 %v466
        %v534 = vpop.f32.mrf.mxu0
        %v535 = vadd.f32 0.0, %v534
        %v536 = vpop.f32.mrf.mxu0
        %537 = vdwg.mxu0
        %v538 = vrcp.pop %v464
        %v539 = vmul.f32 %v535, %v538
        %v540 = vpack.c.bf16 %v539, %v539
        %v541 = vld [vmem:[%s4] sm:$0xf]
        %v542 = vld [vmem:[%s4 + $0x4] sm:$0xf]
        %v543 = vld [vmem:[%s4 + $0x8] sm:$0xf]
        %v544 = vld [vmem:[%s4 + $0xc] sm:$0xf]
        %v545 = vld [vmem:[%s4 + $0x10] sm:$0xf]
        %v546 = vld [vmem:[%s4 + $0x14] sm:$0xf]
        %v547 = vld [vmem:[%s4 + $0x18] sm:$0xf]
        %v548 = vld [vmem:[%s4 + $0x1c] sm:$0xf]
        %549 = vrot.lane.b32.xlu0 %v332, 64
        %v550 = vpop.permute.xlu0 %549
        %551 = vrot.lane.b32.xlu0 %v334, 64
        %v552 = vpop.permute.xlu0 %551
        %v553 = vsel %vm378, %v550, 0
        %v555 = vsel %vm378, %v552, 0
        %557 = vmatprep.subr.mxu0 0.0
        %558 = vmatpush1.xpose.msra.mxu0 0.0
        %559 = vmatprep.subr.mxu0 0.0
        %560 = vmatpush1.xpose.msra.mxu0 0.0
        %561 = vmatprep.subr.mxu0 0.0
        %562 = vmatpush1.xpose.msra.mxu0 0.0
        %563 = vmatprep.subr.mxu0 0.0
        %564 = vmatpush1.xpose.msra.mxu0 0.0
        %565 = vmatprep.subr.mxu0 0.0
        %566 = vmatpush1.xpose.msra.mxu0 0.0
        %567 = vmatprep.subr.mxu0 0.0
        %568 = vmatpush1.xpose.msra.mxu0 0.0
        %569 = vmatprep.subr.mxu0 0.0
        %570 = vmatpush1.xpose.msra.mxu0 0.0
        %571 = vmatprep.subr.mxu0 0.0
        %572 = vmatpush1.xpose.msra.mxu0 0.0
        %573 = vmatprep.subr.mxu0 0.0
        %574 = vmatpush1.xpose.msra.mxu0 0.0
        %575 = vmatprep.subr.mxu0 0.0
        %576 = vmatpush1.xpose.msra.mxu0 0.0
        %577 = vmatprep.subr.mxu0 0.0
        %578 = vmatpush1.xpose.msra.mxu0 0.0
        %579 = vmatprep.subr.mxu0 0.0
        %580 = vmatpush1.xpose.msra.mxu0 0.0
        %581 = vmatprep.subr.mxu0 0.0
        %582 = vmatpush1.xpose.msra.mxu0 0.0
        %583 = vmatprep.subr.mxu0 0.0
        %584 = vmatpush1.xpose.msra.mxu0 0.0
        %585 = vmatprep.subr.mxu0 0.0
        %586 = vmatpush1.xpose.msra.mxu0 0.0
        %587 = vmatprep.subr.mxu0 0.0
        %588 = vmatpush1.xpose.msra.mxu0 %v555
        %589 = vmatprep.subr.mxu0 0.0
        %590 = vmatpush2.xpose.msra.mxu0 0.0
        %591 = vmatprep.subr.mxu0 0.0
        %592 = vmatpush2.xpose.msra.mxu0 0.0
        %593 = vmatprep.subr.mxu0 0.0
        %594 = vmatpush2.xpose.msra.mxu0 0.0
        %595 = vmatprep.subr.mxu0 0.0
        %596 = vmatpush2.xpose.msra.mxu0 0.0
        %597 = vmatprep.subr.mxu0 0.0
        %598 = vmatpush2.xpose.msra.mxu0 0.0
        %599 = vmatprep.subr.mxu0 0.0
        %600 = vmatpush2.xpose.msra.mxu0 0.0
        %601 = vmatprep.subr.mxu0 0.0
        %602 = vmatpush2.xpose.msra.mxu0 0.0
        %603 = vmatprep.subr.mxu0 0.0
        %604 = vmatpush2.xpose.msra.mxu0 0.0
        %605 = vmatprep.subr.mxu0 0.0
        %606 = vmatpush2.xpose.msra.mxu0 0.0
        %607 = vmatprep.subr.mxu0 0.0
        %608 = vmatpush2.xpose.msra.mxu0 0.0
        %609 = vmatprep.subr.mxu0 0.0
        %610 = vmatpush2.xpose.msra.mxu0 0.0
        %611 = vmatprep.subr.mxu0 0.0
        %612 = vmatpush2.xpose.msra.mxu0 0.0
        %613 = vmatprep.subr.mxu0 0.0
        %614 = vmatpush2.xpose.msra.mxu0 0.0
        %615 = vmatprep.subr.mxu0 0.0
        %616 = vmatpush2.xpose.msra.mxu0 0.0
        %617 = vmatprep.subr.mxu0 0.0
        %618 = vmatpush2.xpose.msra.mxu0 0.0
        %619 = vmatprep.subr.mxu0 0.0
        %620 = vmatpush2.xpose.msra.mxu0 0.0
        %621 = vmatprep.mubr.f32.mxu0 0.0
        %622 = vmatmul.mubr.f32.gmra.mxu0 %v553
        %v623 = vpop.f32.mrf.mxu0
        %v624 = vadd.f32 0.0, %v623
        %v625 = vpop.f32.mrf.mxu0
        %626 = vdwg.mxu0
        %v627 = vsel %vm455, %v624, -inf
        %628 = vmax.xlane.f32.xlu0 %v627
        %v629 = vpop.xlane.xlu0 %628
        %v630 = vsub.f32 %v624, %v629
        %v631 = vmul.f32 %v630, 1.442695
        %v632 = vpow.pop %v631
        %v633 = vsel %vm455, %v632, 0.0
        %634 = vadd.xlane.f32.xlu0 %v633
        %v635 = vpop.xlane.xlu0 %634
        %637 = vrot.lane.b32.xlu0 %v373, 64
        %v638 = vpop.permute.xlu0 %637
        %v641 = vsel %vm455, %v632, 0
        %643 = vmatprep.subr.mxu0 0.0
        %644 = vmatpush1.msra.mxu0 0.0
        %645 = vmatprep.subr.mxu0 0.0
        %646 = vmatpush1.msra.mxu0 0.0
        %647 = vmatprep.subr.mxu0 0.0
        %648 = vmatpush1.msra.mxu0 0.0
        %649 = vmatprep.subr.mxu0 0.0
        %650 = vmatpush1.msra.mxu0 0.0
        %651 = vmatprep.subr.mxu0 0.0
        %652 = vmatpush1.msra.mxu0 0.0
        %653 = vmatprep.subr.mxu0 0.0
        %654 = vmatpush1.msra.mxu0 0.0
        %655 = vmatprep.subr.mxu0 0.0
        %656 = vmatpush1.msra.mxu0 0.0
        %657 = vmatprep.subr.mxu0 0.0
        %658 = vmatpush1.msra.mxu0 0.0
        %659 = vmatprep.subr.mxu0 0.0
        %660 = vmatpush1.msra.mxu0 0.0
        %661 = vmatprep.subr.mxu0 0.0
        %662 = vmatpush1.msra.mxu0 0.0
        %663 = vmatprep.subr.mxu0 0.0
        %664 = vmatpush1.msra.mxu0 0.0
        %665 = vmatprep.subr.mxu0 0.0
        %666 = vmatpush1.msra.mxu0 0.0
        %667 = vmatprep.subr.mxu0 0.0
        %668 = vmatpush1.msra.mxu0 0.0
        %669 = vmatprep.subr.mxu0 0.0
        %670 = vmatpush1.msra.mxu0 0.0
        %671 = vmatprep.subr.mxu0 0.0
        %672 = vmatpush1.msra.mxu0 0.0
        %673 = vmatprep.subr.mxu0 0.0
        %674 = vmatpush1.msra.mxu0 %v638
        %675 = vmatprep.subr.mxu0 0.0
        %676 = vmatpush2.msra.mxu0 0.0
        %677 = vmatprep.subr.mxu0 0.0
        %678 = vmatpush2.msra.mxu0 0.0
        %679 = vmatprep.subr.mxu0 0.0
        %680 = vmatpush2.msra.mxu0 0.0
        %681 = vmatprep.subr.mxu0 0.0
        %682 = vmatpush2.msra.mxu0 0.0
        %683 = vmatprep.subr.mxu0 0.0
        %684 = vmatpush2.msra.mxu0 0.0
        %685 = vmatprep.subr.mxu0 0.0
        %686 = vmatpush2.msra.mxu0 0.0
        %687 = vmatprep.subr.mxu0 0.0
        %688 = vmatpush2.msra.mxu0 0.0
        %689 = vmatprep.subr.mxu0 0.0
        %690 = vmatpush2.msra.mxu0 0.0
        %691 = vmatprep.subr.mxu0 0.0
        %692 = vmatpush2.msra.mxu0 0.0
        %693 = vmatprep.subr.mxu0 0.0
        %694 = vmatpush2.msra.mxu0 0.0
        %695 = vmatprep.subr.mxu0 0.0
        %696 = vmatpush2.msra.mxu0 0.0
        %697 = vmatprep.subr.mxu0 0.0
        %698 = vmatpush2.msra.mxu0 0.0
        %699 = vmatprep.subr.mxu0 0.0
        %700 = vmatpush2.msra.mxu0 0.0
        %701 = vmatprep.subr.mxu0 0.0
        %702 = vmatpush2.msra.mxu0 0.0
        %703 = vmatprep.subr.mxu0 0.0
        %704 = vmatpush2.msra.mxu0 0.0
        %705 = vmatprep.subr.mxu0 0.0
        %706 = vmatpush2.msra.mxu0 0.0
        %707 = vmatprep.mubr.f32.mxu0 0.0
        %708 = vmatmul.mubr.f32.gmra.mxu0 %v641
        %v709 = vpop.f32.mrf.mxu0
        %v710 = vadd.f32 0.0, %v709
        %v711 = vpop.f32.mrf.mxu0
        %712 = vdwg.mxu0
        %v713 = vrcp.pop %v635
        %v714 = vmul.f32 %v710, %v713
        %v715 = vpack.c.bf16 %v714, %v714
        %v716 = vld [vmem:[%s4 + $0x20] sm:$0xf]
        %v717 = vld [vmem:[%s4 + $0x24] sm:$0xf]
        %v718 = vld [vmem:[%s4 + $0x28] sm:$0xf]
        %v719 = vld [vmem:[%s4 + $0x2c] sm:$0xf]
        %v720 = vld [vmem:[%s4 + $0x30] sm:$0xf]
        %v721 = vld [vmem:[%s4 + $0x34] sm:$0xf]
        %v722 = vld [vmem:[%s4 + $0x38] sm:$0xf]
        %v723 = vld [vmem:[%s4 + $0x3c] sm:$0xf]
        %v732 = vunpack.c.l.b16 %v716
        %v733 = vunpack.c.l.b16 %v717
        %v734 = vunpack.c.l.b16 %v718
        %v735 = vunpack.c.l.b16 %v719
        %v736 = vunpack.c.l.b16 %v720
        %v737 = vunpack.c.l.b16 %v721
        %v738 = vunpack.c.l.b16 %v722
        %v739 = vunpack.c.l.b16 %v723
        %v740 = vpack.c.b16 %v733, %v732
        %v741 = vpack.c.b16 %v735, %v734
        %v742 = vpack.c.b16 %v737, %v736
        %v743 = vpack.c.b16 %v739, %v738
        %v749 = vsel %vm378, %v715, 0
        %751 = vmatprep.subr.bf16.mxu0 0
        %752 = vmatpush1.bf16.msra.mxu0 0
        %753 = vmatprep.subr.bf16.mxu0 0
        %754 = vmatpush1.bf16.msra.mxu0 0
        %755 = vmatprep.subr.bf16.mxu0 0
        %756 = vmatpush1.bf16.msra.mxu0 0
        %757 = vmatprep.subr.bf16.mxu0 0
        %758 = vmatpush1.bf16.msra.mxu0 0
        %759 = vmatprep.subr.bf16.mxu0 0
        %760 = vmatpush1.bf16.msra.mxu0 %v743
        %761 = vmatprep.subr.bf16.mxu0 0
        %762 = vmatpush1.bf16.msra.mxu0 %v742
        %763 = vmatprep.subr.bf16.mxu0 0
        %764 = vmatpush1.bf16.msra.mxu0 %v741
        %765 = vmatprep.subr.bf16.mxu0 0
        %766 = vmatpush1.bf16.msra.mxu0 %v740
        %767 = vmatprep.subr.bf16.mxu0 0
        %768 = vmatpush2.bf16.msra.mxu0 0
        %769 = vmatprep.subr.bf16.mxu0 0
        %770 = vmatpush2.bf16.msra.mxu0 0
        %771 = vmatprep.subr.bf16.mxu0 0
        %772 = vmatpush2.bf16.msra.mxu0 0
        %773 = vmatprep.subr.bf16.mxu0 0
        %774 = vmatpush2.bf16.msra.mxu0 0
        %775 = vmatprep.subr.bf16.mxu0 0
        %776 = vmatpush2.bf16.msra.mxu0 0
        %777 = vmatprep.subr.bf16.mxu0 0
        %778 = vmatpush2.bf16.msra.mxu0 0
        %779 = vmatprep.subr.bf16.mxu0 0
        %780 = vmatpush2.bf16.msra.mxu0 0
        %781 = vmatprep.subr.bf16.mxu0 0
        %782 = vmatpush2.bf16.msra.mxu0 0
        %783 = vmatprep.mubr.bf16.mxu0 0
        %784 = vmatmul.mubr.bf16.gmra.mxu0 %v749
        %v785 = vpop.f32.mrf.mxu0
        %v786 = vadd.f32 0.0, %v785
        %v787 = vpop.f32.mrf.mxu0
        %v788 = vpop.f32.mrf.mxu0
        %v789 = vpop.f32.mrf.mxu0
        %790 = vdwg.mxu0
        %v799 = vunpack.c.l.b16 %v541
        %v800 = vunpack.c.l.b16 %v542
        %v801 = vunpack.c.l.b16 %v543
        %v802 = vunpack.c.l.b16 %v544
        %v803 = vunpack.c.l.b16 %v545
        %v804 = vunpack.c.l.b16 %v546
        %v805 = vunpack.c.l.b16 %v547
        %v806 = vunpack.c.l.b16 %v548
        %v807 = vpack.c.b16 %v800, %v799
        %v808 = vpack.c.b16 %v802, %v801
        %v809 = vpack.c.b16 %v804, %v803
        %v810 = vpack.c.b16 %v806, %v805
        %v816 = vsel %vm378, %v540, 0
        %818 = vmatprep.subr.bf16.mxu0 0
        %819 = vmatpush1.bf16.msra.mxu0 0
        %820 = vmatprep.subr.bf16.mxu0 0
        %821 = vmatpush1.bf16.msra.mxu0 0
        %822 = vmatprep.subr.bf16.mxu0 0
        %823 = vmatpush1.bf16.msra.mxu0 0
        %824 = vmatprep.subr.bf16.mxu0 0
        %825 = vmatpush1.bf16.msra.mxu0 0
        %826 = vmatprep.subr.bf16.mxu0 0
        %827 = vmatpush1.bf16.msra.mxu0 %v810
        %828 = vmatprep.subr.bf16.mxu0 0
        %829 = vmatpush1.bf16.msra.mxu0 %v809
        %830 = vmatprep.subr.bf16.mxu0 0
        %831 = vmatpush1.bf16.msra.mxu0 %v808
        %832 = vmatprep.subr.bf16.mxu0 0
        %833 = vmatpush1.bf16.msra.mxu0 %v807
        %834 = vmatprep.subr.bf16.mxu0 0
        %835 = vmatpush2.bf16.msra.mxu0 0
        %836 = vmatprep.subr.bf16.mxu0 0
        %837 = vmatpush2.bf16.msra.mxu0 0
        %838 = vmatprep.subr.bf16.mxu0 0
        %839 = vmatpush2.bf16.msra.mxu0 0
        %840 = vmatprep.subr.bf16.mxu0 0
        %841 = vmatpush2.bf16.msra.mxu0 0
        %842 = vmatprep.subr.bf16.mxu0 0
        %843 = vmatpush2.bf16.msra.mxu0 0
        %844 = vmatprep.subr.bf16.mxu0 0
        %845 = vmatpush2.bf16.msra.mxu0 0
        %846 = vmatprep.subr.bf16.mxu0 0
        %847 = vmatpush2.bf16.msra.mxu0 0
        %848 = vmatprep.subr.bf16.mxu0 0
        %849 = vmatpush2.bf16.msra.mxu0 0
        %850 = vmatprep.mubr.bf16.mxu0 0
        %851 = vmatmul.mubr.bf16.gmra.mxu0 %v816
        %v852 = vpop.f32.mrf.mxu0
        %v853 = vadd.f32 %v786, %v852
        %v854 = vpop.f32.mrf.mxu0
        %v855 = vpop.f32.mrf.mxu0
        %v856 = vpop.f32.mrf.mxu0
        %857 = vdwg.mxu0
        %858 = vst.msk [vmem:[%s215] sm:$0xff] %vm222, %v853
        %s859 = sand.u32 %s137, 1
        %s860 = scalar_lea.sflag [#allocation3], %s859
        %s861 = sand.u32 %s137, 1
        %s862 = smul.addr %s861, 8
        %s863 = scalar_lea.vmem [#allocation2], %s862
        // Predicated region
        $region41: #{tpu_custom_call.1} parent=39 // pred_check
          %p864 = pneg %p147
        $region42: #{tpu_custom_call.1} parent=39 // pred_check_branch
          %866 = sbr.rel (%p864) target = $region44
        $region43: #{tpu_custom_call.1} parent=39 // pred_region
          %s868 = ssub.s32 128, 128
          %869 = vsyncadd %s860, %s868
          %s870 = smul.addr %s19, 128
          %s871 = scalar_lea.hbm %s5, %s870
          %s873 = sshll.u32 %s863, 4
          %s874 = int_to_ptr.vmem [resolvable:$true] %s873
          %876 = dma.vmem_to_hbm [thread:$0]  %s874, 128, %s871, %s860
        $region44: #{tpu_custom_call.1} parent=39 // pred_fallthru
          _
      $region40: #{tpu_custom_call.1} parent=5 // pred_fallthru
        _
      %p877 = scmp.le.s32.totalorder 2, %s14
      // Predicated region
      $region45: #{tpu_custom_call.1} parent=5 // pred_check
        %p878 = pneg %p877
      $region46: #{tpu_custom_call.1} parent=5 // pred_check_branch
        %880 = sbr.rel (%p878) target = $region48
      $region47: #{tpu_custom_call.1} parent=5 // pred_region
        %s881 = ssub.s32 %s14, 2
        // Predicated region
        $region49: #{tpu_custom_call.1} parent=47 // pred_check
          %p882 = pneg %p153
        $region50: #{tpu_custom_call.1} parent=47 // pred_check_branch
          %884 = sbr.rel (%p882) target = $region52
        $region51: #{tpu_custom_call.1} parent=47 // pred_region
          %s885 = sand.u32 %s138, 1
          %s886 = scalar_lea.sflag [#allocation3], %s885
          %s887 = sand.u32 %s138, 1
          %s888 = smul.addr %s887, 8
          %s889 = scalar_lea.vmem [#allocation2], %s888
          %890 = dma.done %s886, 128
        $region52: #{tpu_custom_call.1} parent=47 // pred_fallthru
          _
      $region48: #{tpu_custom_call.1} parent=5 // pred_fallthru
        _
    $region6: #{tpu_custom_call.1} parent=1 // loop_footer
      %s18 = sadd.s32 1, %s14
    $region7: #{tpu_custom_call.1} parent=1 // loop_footer_branch
      %13 = sbr.rel target = $region3
    $region8: #{tpu_custom_call.1} parent=1 // loop_exit
      _
    %891 = vsyncpa [#allocation3], 1
    %s892 = scalar_lea.sflag [#allocation3], 1
    %893 = vsyncpa %s892, 1

</llo_original>
